<compile_context>
chip_gen: v6e
topology: v6e:2x2x1
jax: 0.10.0
libtpu: 0.0.40
codegen_flags: <defaults>
</compile_context>

<pallas_src>
import functools

import jax
import jax.numpy as jnp
from jax import lax
from jax.experimental import pallas as pl
from jax.experimental.pallas import tpu as pltpu


def _round_up(x: int, m: int) -> int:
    return ((x + m - 1) // m) * m


def _logreg_kernel(x_ref, wt_ref, b_ref, out_ref, acc_ref, *,
                   multiclass: bool, d_total: int, tile_k: int, mask_k: bool):
    k = pl.program_id(1)
    nk = pl.num_programs(1)

    @pl.when(k == 0)
    def _():
        acc_ref[...] = jnp.zeros_like(acc_ref)

    x = x_ref[...]
    if mask_k:
        # Ragged last K block: zero out columns >= D so they cannot pollute the
        # accumulation (W_t is zero-padded along K in the wrapper as well).
        col = lax.broadcasted_iota(jnp.int32, x.shape, 1) + k * tile_k
        x = jnp.where(col < d_total, x, jnp.zeros_like(x))

    # x @ W^T computed as x_tile [TILE_B, TILE_K] @ W_t tile [TILE_K, C]:
    # MXU-native [K, N] RHS layout, f32 accumulation.
    acc_ref[...] += jnp.dot(x, wt_ref[...], preferred_element_type=jnp.float32)

    @pl.when(k == nk - 1)
    def _():
        logits = acc_ref[...] + b_ref[...]          # (1, C) bias broadcasts over rows
        if multiclass:
            # Numerically-stable softmax over the (exact, un-padded) class dim.
            m = jnp.max(logits, axis=-1, keepdims=True)
            e = jnp.exp(logits - m)
            denom = jnp.sum(e, axis=-1, keepdims=True)
            probs = e * pl.reciprocal(denom, approx=True)   # EUP, own VLIW slot
        else:
            probs = pl.reciprocal(1.0 + jnp.exp(-logits), approx=True)
        out_ref[...] = probs.astype(out_ref.dtype)


def logistic_regression_forward(x, weight, bias):
    """x: [B, D], weight: [C, D], bias: [C] -> [B, C] probabilities."""
    B, D = x.shape
    C, D2 = weight.shape
    assert D == D2
    multiclass = C != 1

    out_dtype = x.dtype
    x_bytes = jnp.dtype(x.dtype).itemsize
    w_bytes = jnp.dtype(weight.dtype).itemsize
    o_bytes = jnp.dtype(out_dtype).itemsize

    # One-time wrapper transpose: MXU-native [K, N] weight layout, amortized
    # across every batch tile.
    w_t = jnp.swapaxes(weight, 0, 1)              # [D, C]
    b_row = bias.reshape(1, C).astype(jnp.float32)

    # ---- generation-aware VMEM budget (v7x: 64 MiB total; v5e/v6e: 128 MiB) ----
    try:
        vmem_phys = int(pltpu.get_tpu_info().vmem_capacity_bytes)
    except Exception:  # pragma: no cover - conservative fallback
        vmem_phys = 64 * 1024 * 1024
    vmem_budget = (vmem_phys * 6) // 10           # leave headroom for Mosaic internals

    def footprint(tb, tk):
        return (2 * tb * tk * x_bytes             # x tiles, double-buffered
                + 2 * tk * C * w_bytes            # W_t tiles, double-buffered
                + 2 * C * 4                       # bias (tiny), 2 bufs
                + 2 * tb * C * o_bytes            # out tiles, double-buffered
                + tb * C * 4)                     # f32 accumulator scratch

    # >= 2 batch tiles when possible so v7x's two TensorCores both get work.
    TILE_B = min(B, max(8, min(512, _round_up(pl.cdiv(B, 2), 8))))
    TILE_K = D
    while footprint(TILE_B, TILE_K) > vmem_budget:
        if TILE_K > 128:
            TILE_K = max(128, _round_up(TILE_K // 2, 128))   # lane-aligned K tiles
        elif TILE_B > 8:
            TILE_B = max(8, _round_up(TILE_B // 2, 8))
        else:
            break

    nk = pl.cdiv(D, TILE_K)
    mask_k = (D % TILE_K) != 0
    if mask_k:
        # Zero-pad the (small) transposed weight along K so every W_t block is
        # full; x stays un-padded in HBM and is masked in-kernel instead.
        d_pad = nk * TILE_K
        w_t = jnp.concatenate(
            [w_t, jnp.zeros((d_pad - D, C), dtype=w_t.dtype)], axis=0)

    grid_b = pl.cdiv(B, TILE_B)
    fp = footprint(TILE_B, TILE_K)
    vmem_limit = int(min(vmem_budget,
                         max(32 * 1024 * 1024, fp + fp // 4 + (2 << 20))))

    kernel = functools.partial(_logreg_kernel, multiclass=multiclass,
                               d_total=D, tile_k=TILE_K, mask_k=mask_k)

    # TODO(synk): for very large class counts (C >= ~512) add a class-dim grid
    # axis with an online-softmax carry so W_t need not stay resident along C.
    return pl.pallas_call(
        kernel,
        out_shape=jax.ShapeDtypeStruct((B, C), out_dtype),
        grid=(grid_b, nk),
        in_specs=[
            pl.BlockSpec((TILE_B, TILE_K), lambda i, k: (i, k)),   # x tile
            pl.BlockSpec((TILE_K, C), lambda i, k: (k, 0)),        # W_t tile
            pl.BlockSpec((1, C), lambda i, k: (0, 0)),             # bias (resident)
        ],
        out_specs=pl.BlockSpec((TILE_B, C), lambda i, k: (i, 0)),
        scratch_shapes=[pltpu.VMEM((TILE_B, C), jnp.float32)],
        compiler_params=pltpu.CompilerParams(
            dimension_semantics=("parallel", "arbitrary"),
            vmem_limit_bytes=vmem_limit,
        ),
    )(x, w_t, b_row)


def _reference_forward(x, weight, bias):
    logits = x @ weight.T + bias
    if weight.shape[0] == 1:
        return jax.nn.sigmoid(logits)
    return jax.nn.softmax(logits, axis=-1)


if __name__ == "__main__":
    key = jax.random.PRNGKey(0)
    k_x, k_w, k_b, k_w1, k_b1 = jax.random.split(key, 5)

    # Multiclass case: input_dim=32, num_classes=8, batch=8
    B, D, C = 8, 32, 8
    x = jax.random.normal(k_x, (B, D), dtype=jnp.float32)
    # Deterministic "Kaiming-uniform-ish" init for nn.Linear params
    bound = 1.0 / (D ** 0.5)
    w = jax.random.uniform(k_w, (C, D), minval=-bound, maxval=bound, dtype=jnp.float32)
    b = jax.random.uniform(k_b, (C,), minval=-bound, maxval=bound, dtype=jnp.float32)

    out = jax.block_until_ready(logistic_regression_forward(x, w, b))
    ref = _reference_forward(x, w, b)
    assert out.shape == (B, C)
    # approx=True reciprocals (EUP) trade a few ulps for a free VLIW slot
    assert jnp.allclose(out, ref, atol=2e-3, rtol=2e-3), "multiclass mismatch"

    # Binary case: num_classes=1 -> sigmoid
    w1 = jax.random.uniform(k_w1, (1, D), minval=-bound, maxval=bound, dtype=jnp.float32)
    b1 = jax.random.uniform(k_b1, (1,), minval=-bound, maxval=bound, dtype=jnp.float32)
    out1 = jax.block_until_ready(logistic_regression_forward(x, w1, b1))
    ref1 = _reference_forward(x, w1, b1)
    assert out1.shape == (B, 1)
    assert jnp.allclose(out1, ref1, atol=2e-3, rtol=2e-3), "binary mismatch"

    print("KERNEL_OK")
</pallas_src>

<mosaic_0001>
module attributes {stable_mosaic.version = 11 : i64} {
  func.func @_logreg_kernel(%arg0: i32, %arg1: i32, %arg2: memref<8x32xf32, #tpu.memory_space<vmem>>, %arg3: memref<32x8xf32, #tpu.memory_space<vmem>>, %arg4: memref<1x8xf32, #tpu.memory_space<vmem>>, %arg5: memref<8x8xf32, #tpu.memory_space<vmem>>, %arg6: memref<8x8xf32, #tpu.memory_space<vmem>>) attributes {dimension_semantics = [#tpu.dimension_semantics<parallel>, #tpu.dimension_semantics<arbitrary>], iteration_bounds = array<i64: 1, 1>, scalar_prefetch = 0 : i64, scratch_operands = 1 : i64, tpu.core_type = #tpu.core_type<tc>, window_params = [{transform_indices = @transform_0, window_bounds = array<i64: 8, 32>}, {transform_indices = @transform_1, window_bounds = array<i64: 32, 8>}, {pipeline_mode = #tpu.pipeline_mode<synchronous>, transform_indices = @transform_2, window_bounds = array<i64: 1, 8>}, {transform_indices = @transform_3, window_bounds = array<i64: 8, 8>}]} {
    %c0_i32 = arith.constant 0 : i32
    %0 = arith.cmpi eq, %arg1, %c0_i32 : i32
    %1 = arith.extui %0 : i1 to i32
    %c0_i32_0 = arith.constant 0 : i32
    %2 = arith.cmpi ne, %1, %c0_i32_0 : i32
    scf.if %2 {
      %cst_10 = arith.constant 0.000000e+00 : f32
      %12 = vector.broadcast %cst_10 : f32 to vector<8x8xf32>
      %c0_11 = arith.constant 0 : index
      %c0_12 = arith.constant 0 : index
      %13 = vector.load %arg6[%c0_11, %c0_12] : memref<8x8xf32, #tpu.memory_space<vmem>>, vector<8x8xf32>
      tpu.vector_store %arg6[%c0_11, %c0_12], %12 {strides = array<i32>} : memref<8x8xf32, #tpu.memory_space<vmem>>, vector<8x8xf32>,
    } else {
    }
    %c0 = arith.constant 0 : index
    %c0_1 = arith.constant 0 : index
    %3 = vector.load %arg2[%c0, %c0_1] : memref<8x32xf32, #tpu.memory_space<vmem>>, vector<8x32xf32>
    %c0_2 = arith.constant 0 : index
    %c0_3 = arith.constant 0 : index
    %4 = vector.load %arg6[%c0_2, %c0_3] : memref<8x8xf32, #tpu.memory_space<vmem>>, vector<8x8xf32>
    %c0_4 = arith.constant 0 : index
    %c0_5 = arith.constant 0 : index
    %5 = vector.load %arg3[%c0_4, %c0_5] : memref<32x8xf32, #tpu.memory_space<vmem>>, vector<32x8xf32>
    %cst = arith.constant dense<0.000000e+00> : vector<8x8xf32>
    %6 = tpu.matmul %3, %5, %cst {dimension_numbers = #tpu.dot_dimension_numbers<[1], [0], [0], [1], [0, 0, 1, 1], [], []>} : vector<8x32xf32>, vector<32x8xf32>, vector<8x8xf32> -> vector<8x8xf32>
    %7 = arith.addf %4, %6 : vector<8x8xf32>
    %c0_6 = arith.constant 0 : index
    %c0_7 = arith.constant 0 : index
    %8 = vector.load %arg6[%c0_6, %c0_7] : memref<8x8xf32, #tpu.memory_space<vmem>>, vector<8x8xf32>
    tpu.vector_store %arg6[%c0_6, %c0_7], %7 {strides = array<i32>} : memref<8x8xf32, #tpu.memory_space<vmem>>, vector<8x8xf32>,
    %c0_i32_8 = arith.constant 0 : i32
    %9 = arith.cmpi eq, %arg1, %c0_i32_8 : i32
    %10 = arith.extui %9 : i1 to i32
    %c0_i32_9 = arith.constant 0 : i32
    %11 = arith.cmpi ne, %10, %c0_i32_9 : i32
    scf.if %11 {
      %c0_10 = arith.constant 0 : index
      %c0_11 = arith.constant 0 : index
      %12 = vector.load %arg6[%c0_10, %c0_11] : memref<8x8xf32, #tpu.memory_space<vmem>>, vector<8x8xf32>
      %c0_12 = arith.constant 0 : index
      %c0_13 = arith.constant 0 : index
      %13 = vector.load %arg4[%c0_12, %c0_13] : memref<1x8xf32, #tpu.memory_space<vmem>>, vector<1x8xf32>
      %14 = vector.broadcast %13 : vector<1x8xf32> to vector<8x8xf32>
      %15 = arith.addf %12, %14 : vector<8x8xf32>
      %cst_14 = arith.constant dense<0xFF800000> : vector<8xf32>
      %16 = vector.multi_reduction <maximumf>, %15, %cst_14 [1] : vector<8x8xf32> to vector<8xf32>
      %17 = vector.shape_cast %16 : vector<8xf32> to vector<8x1xf32>
      %18 = vector.broadcast %17 : vector<8x1xf32> to vector<8x8xf32>
      %19 = arith.subf %15, %18 : vector<8x8xf32>
      %20 = math.exp %19 : vector<8x8xf32>
      %cst_15 = arith.constant dense<0.000000e+00> : vector<8xf32>
      %21 = vector.multi_reduction <add>, %20, %cst_15 [1] : vector<8x8xf32> to vector<8xf32>
      %22 = vector.shape_cast %21 : vector<8xf32> to vector<8x1xf32>
      %23 = tpu.reciprocal %22 {approx = true} : vector<8x1xf32> -> vector<8x1xf32>
      %24 = vector.broadcast %23 : vector<8x1xf32> to vector<8x8xf32>
      %25 = arith.mulf %20, %24 : vector<8x8xf32>
      %c0_16 = arith.constant 0 : index
      %c0_17 = arith.constant 0 : index
      %26 = vector.load %arg5[%c0_16, %c0_17] : memref<8x8xf32, #tpu.memory_space<vmem>>, vector<8x8xf32>
      tpu.vector_store %arg5[%c0_16, %c0_17], %25 {strides = array<i32>} : memref<8x8xf32, #tpu.memory_space<vmem>>, vector<8x8xf32>,
    } else {
    }
    return
  }
  func.func @transform_0(%arg0: i32, %arg1: i32) -> (i32, i32) {
    %c0_i32 = arith.constant 0 : i32
    return %arg0, %arg1 : i32, i32
  }
  func.func @transform_1(%arg0: i32, %arg1: i32) -> (i32, i32) {
    %c0_i32 = arith.constant 0 : i32
    %c0_i32_0 = arith.constant 0 : i32
    return %arg1, %c0_i32 : i32, i32
  }
  func.func @transform_2(%arg0: i32, %arg1: i32) -> (i32, i32) {
    %c0_i32 = arith.constant 0 : i32
    %c0_i32_0 = arith.constant 0 : i32
    %c0_i32_1 = arith.constant 0 : i32
    return %c0_i32, %c0_i32_0 : i32, i32
  }
  func.func @transform_3(%arg0: i32, %arg1: i32) -> (i32, i32) {
    %c0_i32 = arith.constant 0 : i32
    %c0_i32_0 = arith.constant 0 : i32
    return %arg0, %c0_i32 : i32, i32
  }
}

</mosaic_0001>

<llo_original>
// kernel: tpu_custom_call.1
$region0: #{tpu_custom_call.1}
  #allocation0 [shape = 'u32[]', space=smem, size = 0x4, offset = 0x4, fixed_abs, tag = 'smem constant byte address 0x4 - core index']
  #allocation1 [shape = 'u32[144,128]{1,0:T(1,128)}', space=vmem, size = 0x12000, scoped, tag = 'internal scratch']
  #allocation2 [shape = 'f32[8,8]{1,0:T(8,128)}', space=vmem, size = 0x1000, scoped, tag = 'scratch operand']
  %s0 = inlined_call_operand.vmem [shape: f32[8,32], index: 0, kind: input, shape index: {}]
  %s1 = inlined_call_operand.vmem [shape: f32[32,8], index: 1, kind: input, shape index: {}]
  %s2 = inlined_call_operand.vmem [shape: f32[1,8], index: 2, kind: input, shape index: {}]
  %s3 = inlined_call_operand.hbm [shape: f32[8,8], index: 3, kind: output, shape index: {}]
  %s4 = sld [smem:[#allocation0]]
  $region30: #{tpu_custom_call.1} parent=0
    _
  %s6 = ssub.s32 1, %s4
  %s7 = scalar_select 0, %s6, %s4
  $region1: #{tpu_custom_call.1} parent=0
    #allocation3 [shape = 'u8[4096]{0}', space=vmem, size = 0x1000, scoped, tag = 'output window, operand 0, single buffered']
    #allocation4 [shape = 's32[1]{0}', space=sflag, size = 0x4, scoped, tag = 'scoped memory for tpu_custom_call.1']
    %8 = vsyncpa [#allocation4], 0
    // Predicated region
    $region2: #{tpu_custom_call.1} parent=1 // pred_check
      _
    $region3: #{tpu_custom_call.1} parent=1 // pred_check_branch
      %10 = sbr.rel (0) target = $region5
    $region4: #{tpu_custom_call.1} parent=1 // pred_region
      _
    $region5: #{tpu_custom_call.1} parent=1 // pred_fallthru
      _
    // Predicated region
    $region6: #{tpu_custom_call.1} parent=1 // pred_check
      _
    $region7: #{tpu_custom_call.1} parent=1 // pred_check_branch
      %12 = sbr.rel (0) target = $region9
    $region8: #{tpu_custom_call.1} parent=1 // pred_region
      _
    $region9: #{tpu_custom_call.1} parent=1 // pred_fallthru
      _
    // Predicated region
    $region10: #{tpu_custom_call.1} parent=1 // pred_check
      _
    $region11: #{tpu_custom_call.1} parent=1 // pred_check_branch
      %14 = sbr.rel (0) target = $region13
    $region12: #{tpu_custom_call.1} parent=1 // pred_region
      _
    $region13: #{tpu_custom_call.1} parent=1 // pred_fallthru
      _
    %p15 = scmp.eq.s32.totalorder 0, 0
    // Predicated region
    $region14: #{tpu_custom_call.1} parent=1 // pred_check
      %p16 = pneg %p15
    $region15: #{tpu_custom_call.1} parent=1 // pred_check_branch
      %18 = sbr.rel (%p16) target = $region17
    $region16: #{tpu_custom_call.1} parent=1 // pred_region
      %vm19 = vcmask 64512
      %20 = vst.msk [vmem:[#allocation2] sm:$0xff] %vm19, 0.0
    $region17: #{tpu_custom_call.1} parent=1 // pred_fallthru
      _
    %v21 = vld [vmem:[%s0] sm:$0xff]
    %v22 = vld [vmem:[#allocation2] sm:$0xff]
    %v23 = vld [vmem:[%s1] sm:$0xff]
    %v24 = vld [vmem:[%s1 + $0x8] sm:$0xff]
    %v25 = vld [vmem:[%s1 + $0x10] sm:$0xff]
    %v26 = vld [vmem:[%s1 + $0x18] sm:$0xff]
    %vm27 = vcmask 261120
    %v29 = vsel %vm27, %v21, 0
    %31 = vmatprep.subr.mxu0 0.0
    %32 = vmatpush1.msra.mxu0 0.0
    %33 = vmatprep.subr.mxu0 0.0
    %34 = vmatpush1.msra.mxu0 0.0
    %35 = vmatprep.subr.mxu0 0.0
    %36 = vmatpush1.msra.mxu0 0.0
    %37 = vmatprep.subr.mxu0 0.0
    %38 = vmatpush1.msra.mxu0 0.0
    %39 = vmatprep.subr.mxu0 0.0
    %40 = vmatpush1.msra.mxu0 0.0
    %41 = vmatprep.subr.mxu0 0.0
    %42 = vmatpush1.msra.mxu0 0.0
    %43 = vmatprep.subr.mxu0 0.0
    %44 = vmatpush1.msra.mxu0 0.0
    %45 = vmatprep.subr.mxu0 0.0
    %46 = vmatpush1.msra.mxu0 0.0
    %47 = vmatprep.subr.mxu0 0.0
    %48 = vmatpush1.msra.mxu0 0.0
    %49 = vmatprep.subr.mxu0 0.0
    %50 = vmatpush1.msra.mxu0 0.0
    %51 = vmatprep.subr.mxu0 0.0
    %52 = vmatpush1.msra.mxu0 0.0
    %53 = vmatprep.subr.mxu0 0.0
    %54 = vmatpush1.msra.mxu0 0.0
    %55 = vmatprep.subr.mxu0 0.0
    %56 = vmatpush1.msra.mxu0 %v26
    %57 = vmatprep.subr.mxu0 0.0
    %58 = vmatpush1.msra.mxu0 %v25
    %59 = vmatprep.subr.mxu0 0.0
    %60 = vmatpush1.msra.mxu0 %v24
    %61 = vmatprep.subr.mxu0 0.0
    %62 = vmatpush1.msra.mxu0 %v23
    %63 = vmatprep.subr.mxu0 0.0
    %64 = vmatpush2.msra.mxu0 0.0
    %65 = vmatprep.subr.mxu0 0.0
    %66 = vmatpush2.msra.mxu0 0.0
    %67 = vmatprep.subr.mxu0 0.0
    %68 = vmatpush2.msra.mxu0 0.0
    %69 = vmatprep.subr.mxu0 0.0
    %70 = vmatpush2.msra.mxu0 0.0
    %71 = vmatprep.subr.mxu0 0.0
    %72 = vmatpush2.msra.mxu0 0.0
    %73 = vmatprep.subr.mxu0 0.0
    %74 = vmatpush2.msra.mxu0 0.0
    %75 = vmatprep.subr.mxu0 0.0
    %76 = vmatpush2.msra.mxu0 0.0
    %77 = vmatprep.subr.mxu0 0.0
    %78 = vmatpush2.msra.mxu0 0.0
    %79 = vmatprep.subr.mxu0 0.0
    %80 = vmatpush2.msra.mxu0 0.0
    %81 = vmatprep.subr.mxu0 0.0
    %82 = vmatpush2.msra.mxu0 0.0
    %83 = vmatprep.subr.mxu0 0.0
    %84 = vmatpush2.msra.mxu0 0.0
    %85 = vmatprep.subr.mxu0 0.0
    %86 = vmatpush2.msra.mxu0 0.0
    %87 = vmatprep.subr.mxu0 0.0
    %88 = vmatpush2.msra.mxu0 0.0
    %89 = vmatprep.subr.mxu0 0.0
    %90 = vmatpush2.msra.mxu0 0.0
    %91 = vmatprep.subr.mxu0 0.0
    %92 = vmatpush2.msra.mxu0 0.0
    %93 = vmatprep.subr.mxu0 0.0
    %94 = vmatpush2.msra.mxu0 0.0
    %95 = vmatprep.mubr.f32.mxu0 0.0
    %96 = vmatmul.mubr.f32.gmra.mxu0 %v29
    %v97 = vpop.f32.mrf.mxu0
    %v98 = vadd.f32 0.0, %v97
    %v99 = vpop.f32.mrf.mxu0
    %100 = vdwg.mxu0
    %v101 = vadd.f32 %v22, %v98
    %vm102 = vcmask 64512
    %103 = vst.msk [vmem:[#allocation2] sm:$0xff] %vm102, %v101
    // Predicated region
    $region18: #{tpu_custom_call.1} parent=1 // pred_check
      %p104 = pneg %p15
    $region19: #{tpu_custom_call.1} parent=1 // pred_check_branch
      %106 = sbr.rel (%p104) target = $region21
    $region20: #{tpu_custom_call.1} parent=1 // pred_region
      %v107 = vld [vmem:[#allocation2] sm:$0xff]
      %v108 = vld [vmem:[%s2] sm:$0x1]
      %v110 = vlaneseq
      %v111 = vshrl.u32 %v110, 7
      %v112 = vsub.s32 0, %v111
      %v113 = vrot.slane %v108, %v112
      %v115 = vadd.f32 %v107, %v113
      %v116 = vsel %vm102, %v115, -inf
      %117 = vmax.xlane.f32.xlu0 %v116
      %v118 = vpop.xlane.xlu0 %117
      %v119 = vsub.f32 %v115, %v118
      %v120 = vmul.f32 %v119, 1.442695
      %v121 = vpow.pop %v120
      %v122 = vsel %vm102, %v121, 0.0
      %123 = vadd.xlane.f32.xlu0 %v122
      %v124 = vpop.xlane.xlu0 %123
      %v125 = vrcp.pop %v124
      %v126 = vmul.f32 %v121, %v125
      %127 = vst.msk [vmem:[#allocation3] sm:$0xff] %vm102, %v126
    $region21: #{tpu_custom_call.1} parent=1 // pred_fallthru
      _
    // Predicated region
    $region22: #{tpu_custom_call.1} parent=1 // pred_check
      _
    $region23: #{tpu_custom_call.1} parent=1 // pred_check_branch
      %129 = sbr.rel (0) target = $region25
    $region24: #{tpu_custom_call.1} parent=1 // pred_region
      %s131 = ssub.s32 128, 128
      %132 = vsyncadd [#allocation4], %s131
      %s134 = sshll.u32 [#allocation3], 4
      %s135 = int_to_ptr.vmem [resolvable:$true] %s134
      %137 = dma.vmem_to_hbm [thread:$0]  %s135, 128, %s3, [#allocation4]
    $region25: #{tpu_custom_call.1} parent=1 // pred_fallthru
      _
    // Predicated region
    $region26: #{tpu_custom_call.1} parent=1 // pred_check
      _
    $region27: #{tpu_custom_call.1} parent=1 // pred_check_branch
      %139 = sbr.rel (0) target = $region29
    $region28: #{tpu_custom_call.1} parent=1 // pred_region
      %140 = dma.done [#allocation4], 128
    $region29: #{tpu_custom_call.1} parent=1 // pred_fallthru
      _
    %141 = vsyncpa [#allocation4], 1

</llo_original>
